<compile_context>
chip_gen: v7x
topology: tpu7x:2x2x1
jax: 0.10.0
libtpu: 0.0.40
codegen_flags: <defaults>
</compile_context>

<pallas_src>
import math

import jax
import jax.numpy as jnp
from jax.experimental import pallas as pl
from jax.experimental.pallas import tpu as pltpu

_LANE = 128


def _round_up(x: int, m: int) -> int:
    return ((x + m - 1) // m) * m


def _sublane(dtype) -> int:
    # Minimum sublane multiple for full-vreg density: 8 f32, 16 bf16, 32 int8/fp8.
    return max(8, 32 // jnp.dtype(dtype).itemsize)


def _vmem_capacity_bytes() -> int:
    try:
        return int(pltpu.get_tpu_info().vmem_capacity_bytes)
    except Exception:
        return 64 * 1024 * 1024  # conservative fallback (v7x per-TC size)


# ---------------------------------------------------------------------------
# Kernels
# ---------------------------------------------------------------------------
def _fast_kernel_bias(x_ref, w_ref, b_ref, o_ref):
    # x: (tm, IN), w: (IN, OUT) resident across M steps, b: (1, OUT), o: (tm, OUT)
    acc = jnp.dot(x_ref[...], w_ref[...], preferred_element_type=jnp.float32)
    o_ref[...] = (acc + b_ref[...].astype(jnp.float32)).astype(o_ref.dtype)


def _fast_kernel_nobias(x_ref, w_ref, o_ref):
    o_ref[...] = jnp.dot(
        x_ref[...], w_ref[...], preferred_element_type=jnp.float32
    ).astype(o_ref.dtype)


def _make_tiled_kernel(has_bias: bool, acc_in_out: bool):
    """General (E, M, N, K) kernel; K is the last ('arbitrary') grid axis."""

    def _compute(x_ref, w_ref, b_ref, o_ref, acc_ref):
        k = pl.program_id(3)
        nk = pl.num_programs(3)
        part = jnp.dot(x_ref[...], w_ref[...], preferred_element_type=jnp.float32)

        if acc_in_out:  # f32 output: accumulate directly into the resident o block
            @pl.when(k == 0)
            def _():
                o_ref[...] = part

            @pl.when(k > 0)
            def _():
                o_ref[...] += part

            if has_bias:
                @pl.when(k == nk - 1)
                def _():
                    o_ref[...] += b_ref[...].astype(jnp.float32)
        else:
            @pl.when(k == 0)
            def _():
                acc_ref[...] = jnp.zeros_like(acc_ref)

            acc_ref[...] += part

            @pl.when(k == nk - 1)
            def _():
                res = acc_ref[...]
                if has_bias:
                    res = res + b_ref[...].astype(jnp.float32)
                o_ref[...] = res.astype(o_ref.dtype)

    if has_bias and acc_in_out:
        def kernel(x_ref, w_ref, b_ref, o_ref):
            _compute(x_ref, w_ref, b_ref, o_ref, None)
    elif has_bias:
        def kernel(x_ref, w_ref, b_ref, o_ref, acc_ref):
            _compute(x_ref, w_ref, b_ref, o_ref, acc_ref)
    elif acc_in_out:
        def kernel(x_ref, w_ref, o_ref):
            _compute(x_ref, w_ref, None, o_ref, None)
    else:
        def kernel(x_ref, w_ref, o_ref, acc_ref):
            _compute(x_ref, w_ref, None, o_ref, acc_ref)
    return kernel


# ---------------------------------------------------------------------------
# Wrapper
# ---------------------------------------------------------------------------
def ensemble_linear(x, weight, bias=None, *, compute_dtype=None,
                    tm=None, tn=None, tk=None):
    """torch.bmm(input, weight) + bias.

    x: (E, B, IN), weight: (E, IN, OUT), bias: (E, 1, OUT) or None -> (E, B, OUT).
    compute_dtype: optional cast of x/weight (e.g. jnp.bfloat16); accumulation
    is always f32 and the output keeps x's original dtype.
    Explicit tm/tn/tk override the automatic choice (tn/tk should be multiples
    of 128); passing tn or tk disables the weight-resident fast path.
    """
    E, B, IN = x.shape
    _, _, OUT = weight.shape
    out_dtype = x.dtype
    has_bias = bias is not None

    cdt = jnp.dtype(compute_dtype) if compute_dtype is not None else jnp.dtype(x.dtype)
    if x.dtype != cdt:
        x = x.astype(cdt)
    if weight.dtype != cdt:
        weight = weight.astype(cdt)

    cs = cdt.itemsize
    osz = jnp.dtype(out_dtype).itemsize
    bsz = jnp.dtype(bias.dtype).itemsize if has_bias else 0
    SUB = _sublane(cdt)

    cap = _vmem_capacity_bytes()
    budget = int(cap * 0.6)  # target for double-buffered tiles
    INp = _round_up(IN, _LANE)
    OUTp = _round_up(OUT, _LANE)
    Bp_min = _round_up(B, SUB)

    w_full = 2 * INp * OUTp * cs                 # double-buffered full weight
    b_full = 2 * OUTp * bsz if has_bias else 0
    row_bytes = 2 * (INp * cs + OUTp * osz)      # one x row + one out row, dbl-buf

    weight_resident = (tn is None and tk is None and
                       w_full + b_full + SUB * row_bytes <= budget)

    if weight_resident:
        # -- fast path: whole per-member weight resident in VMEM; grid (E, B/tm).
        if tm is None:
            tm_max = (budget - w_full - b_full) // row_bytes
            tm_ = min(Bp_min, max(SUB, (tm_max // SUB) * SUB))
        else:
            tm_ = max(SUB, min(_round_up(tm, SUB), Bp_min))
        # Keep >= 2 parallel grid steps when possible (v7x has 2 TensorCores).
        if E == 1 and tm_ >= Bp_min and Bp_min >= 2 * SUB:
            tm_ = _round_up((B + 1) // 2, SUB)
        Bp = _round_up(B, tm_)

        grid = (E, Bp // tm_)
        in_specs = [
            pl.BlockSpec((None, tm_, INp), lambda e, m: (e, m, 0)),
            pl.BlockSpec((None, INp, OUTp), lambda e, m: (e, 0, 0)),
        ]
        if has_bias:
            in_specs.append(pl.BlockSpec((None, 1, OUTp), lambda e, m: (e, 0, 0)))
        out_specs = pl.BlockSpec((None, tm_, OUTp), lambda e, m: (e, m, 0))
        scratch_shapes = []
        kernel = _fast_kernel_bias if has_bias else _fast_kernel_nobias
        dim_sem = ("parallel", "parallel")

        vmem_est = 2 * tm_ * INp * cs + w_full + b_full + 2 * tm_ * OUTp * osz
        bytes_accessed = (E * B * IN * cs + E * IN * OUT * cs + E * B * OUT * osz
                          + (E * OUT * bsz if has_bias else 0))
    else:
        # -- general path: (E, M, N, K) grid, reduction axis last.
        acc_in_out = jnp.dtype(out_dtype) == jnp.dtype(jnp.float32)
        tm_ = max(SUB, (min(tm or 512, Bp_min) // SUB) * SUB)
        tn_ = max(_LANE, (min(tn or 1024, OUTp) // _LANE) * _LANE)
        if tk is None:
            while True:
                fixed = (2 * tm_ * tn_ * osz
                         + (2 * tn_ * bsz if has_bias else 0)
                         + (0 if acc_in_out else tm_ * tn_ * 4))
                tk_max = max(0, budget - fixed) // (2 * (tm_ + tn_) * cs)
                if tk_max >= _LANE or (tn_ == _LANE and tm_ == SUB):
                    break
                if tn_ > _LANE:
                    tn_ //= 2
                else:
                    tm_ = max(SUB, tm_ // 2)
            tk_ = min(INp, max(_LANE, (tk_max // _LANE) * _LANE))
        else:
            tk_ = min(tk, INp)

        Bp = _round_up(B, tm_)
        INp = _round_up(IN, tk_)
        OUTp = _round_up(OUT, tn_)

        grid = (E, Bp // tm_, OUTp // tn_, INp // tk_)
        in_specs = [
            pl.BlockSpec((None, tm_, tk_), lambda e, m, n, k: (e, m, k)),
            pl.BlockSpec((None, tk_, tn_), lambda e, m, n, k: (e, k, n)),
        ]
        if has_bias:
            in_specs.append(
                pl.BlockSpec((None, 1, tn_), lambda e, m, n, k: (e, 0, n)))
        out_specs = pl.BlockSpec((None, tm_, tn_), lambda e, m, n, k: (e, m, n))
        scratch_shapes = [] if acc_in_out else [pltpu.VMEM((tm_, tn_), jnp.float32)]
        kernel = _make_tiled_kernel(has_bias, acc_in_out)
        dim_sem = ("parallel", "parallel", "parallel", "arbitrary")

        vmem_est = (2 * (tm_ * tk_ + tk_ * tn_) * cs + 2 * tm_ * tn_ * osz
                    + (2 * tn_ * bsz if has_bias else 0)
                    + (0 if acc_in_out else tm_ * tn_ * 4))
        n_reread_x = OUTp // tn_
        n_reread_w = Bp // tm_
        bytes_accessed = (E * B * IN * cs * n_reread_x
                          + E * IN * OUT * cs * n_reread_w
                          + E * B * OUT * osz
                          + (E * OUT * bsz * n_reread_w if has_bias else 0))

    # -- pad only when shapes are ragged (zero-pad keeps the K reduction exact).
    xp = x if (Bp == B and INp == IN) else jnp.pad(
        x, ((0, 0), (0, Bp - B), (0, INp - IN)))
    wp = weight if (INp == IN and OUTp == OUT) else jnp.pad(
        weight, ((0, 0), (0, INp - IN), (0, OUTp - OUT)))
    inputs = [xp, wp]
    if has_bias:
        bp = bias if OUTp == OUT else jnp.pad(
            bias, ((0, 0), (0, 0), (0, OUTp - OUT)))
        inputs.append(bp)

    vmem_limit = int(min(int(cap * 0.9),
                         max(int(vmem_est * 1.3), 32 * 1024 * 1024)))

    cost = pl.CostEstimate(
        flops=2 * E * B * IN * OUT,
        transcendentals=0,
        bytes_accessed=int(bytes_accessed),
    )

    out = pl.pallas_call(
        kernel,
        out_shape=jax.ShapeDtypeStruct((E, Bp, OUTp), out_dtype),
        grid_spec=pltpu.PrefetchScalarGridSpec(
            num_scalar_prefetch=0,
            grid=grid,
            in_specs=in_specs,
            out_specs=out_specs,
            scratch_shapes=scratch_shapes,
        ),
        compiler_params=pltpu.CompilerParams(
            dimension_semantics=dim_sem,
            vmem_limit_bytes=vmem_limit,
        ),
        cost_estimate=cost,
    )(*inputs)

    if Bp != B or OUTp != OUT:
        out = out[:, :B, :OUT]
    return out


def init_ensemble_linear_params(key, num_ensembles, in_features, out_features,
                                dtype=jnp.float32):
    """Mirrors EnsembleLinear.reset_parameters exactly.

    PyTorch's _calculate_fan_in_and_fan_out on a 3-D (E, IN, OUT) weight gives
    fan_in = IN * OUT (trailing dims count as receptive field)."""
    kw, kb = jax.random.split(key)
    fan_in = in_features * out_features
    gain = math.sqrt(2.0 / (1.0 + 5.0))            # kaiming_uniform_(a=sqrt(5))
    w_bound = gain * math.sqrt(3.0 / fan_in)
    weight = jax.random.uniform(
        kw, (num_ensembles, in_features, out_features),
        minval=-w_bound, maxval=w_bound, dtype=dtype)
    b_bound = 1.0 / math.sqrt(fan_in)
    bias = jax.random.uniform(
        kb, (num_ensembles, 1, out_features),
        minval=-b_bound, maxval=b_bound, dtype=dtype)
    return weight, bias


if __name__ == "__main__":
    key = jax.random.PRNGKey(0)
    hi = jax.lax.Precision.HIGHEST

    # --- Test 1: small shapes consistent with the module (fast path, f32).
    E, B, IN, OUT = 4, 8, 32, 32
    k_x, k_p, k_rest = jax.random.split(key, 3)
    x = jax.random.normal(k_x, (E, B, IN), dtype=jnp.float32)
    weight, bias = init_ensemble_linear_params(k_p, E, IN, OUT)

    out = jax.block_until_ready(ensemble_linear(x, weight, bias))
    ref = jnp.einsum("ebi,eio->ebo", x, weight, precision=hi) + bias
    assert out.shape == (E, B, OUT)
    assert jnp.allclose(out, ref, atol=1e-4, rtol=1e-4)

    # --- Test 2: ragged shapes to exercise the padding path (fast path, f32).
    E2, B2, IN2, OUT2 = 3, 5, 40, 24
    k_x2, k_p2 = jax.random.split(k_rest)
    x2 = jax.random.normal(k_x2, (E2, B2, IN2), dtype=jnp.float32)
    w2, b2 = init_ensemble_linear_params(k_p2, E2, IN2, OUT2)

    out2 = jax.block_until_ready(ensemble_linear(x2, w2, b2))
    ref2 = jnp.einsum("ebi,eio->ebo", x2, w2, precision=hi) + b2
    assert out2.shape == (E2, B2, OUT2)
    assert jnp.allclose(out2, ref2, atol=1e-4, rtol=1e-4)

    # --- Test 3: bf16 compute path (f32 accumulation, f32 output), loose tol.
    out3 = jax.block_until_ready(
        ensemble_linear(x, weight, bias, compute_dtype=jnp.bfloat16))
    assert out3.shape == (E, B, OUT)
    assert jnp.allclose(out3, ref, atol=2e-2, rtol=5e-2)

    # --- Test 4: force the general K-tiled path with explicit tiles.
    out4 = jax.block_until_ready(
        ensemble_linear(x2, w2, b2, tm=8, tn=128, tk=128))
    assert out4.shape == (E2, B2, OUT2)
    assert jnp.allclose(out4, ref2, atol=1e-4, rtol=1e-4)

    # --- Test 5: bias=None (no bias operand is DMA'd at all).
    out5 = jax.block_until_ready(ensemble_linear(x, weight, None))
    ref5 = jnp.einsum("ebi,eio->ebo", x, weight, precision=hi)
    assert jnp.allclose(out5, ref5, atol=1e-4, rtol=1e-4)

    print("KERNEL_OK")
</pallas_src>

<mosaic_0001>
module attributes {stable_mosaic.version = 11 : i64} {
  func.func @_fast_kernel_bias(%arg0: i32, %arg1: i32, %arg2: memref<1x8x128xf32, #tpu.memory_space<vmem>>, %arg3: memref<1x128x128xf32, #tpu.memory_space<vmem>>, %arg4: memref<1x1x128xf32, #tpu.memory_space<vmem>>, %arg5: memref<1x8x128xf32, #tpu.memory_space<vmem>>) attributes {dimension_semantics = [#tpu.dimension_semantics<parallel>, #tpu.dimension_semantics<parallel>], iteration_bounds = array<i64: 4, 1>, scalar_prefetch = 0 : i64, scratch_operands = 0 : i64, tpu.core_type = #tpu.core_type<tc>, window_params = [{transform_indices = @transform_0, window_bounds = array<i64: 1, 8, 128>}, {transform_indices = @transform_1, window_bounds = array<i64: 1, 128, 128>}, {transform_indices = @transform_2, window_bounds = array<i64: 1, 1, 128>}, {transform_indices = @transform_3, window_bounds = array<i64: 1, 8, 128>}]} {
    %c0 = arith.constant 0 : index
    %c0_0 = arith.constant 0 : index
    %c0_1 = arith.constant 0 : index
    %0 = vector.load %arg2[%c0, %c0_0, %c0_1] : memref<1x8x128xf32, #tpu.memory_space<vmem>>, vector<1x8x128xf32>
    %1 = vector.shape_cast %0 : vector<1x8x128xf32> to vector<8x128xf32>
    %c0_2 = arith.constant 0 : index
    %c0_3 = arith.constant 0 : index
    %c0_4 = arith.constant 0 : index
    %2 = vector.load %arg3[%c0_2, %c0_3, %c0_4] : memref<1x128x128xf32, #tpu.memory_space<vmem>>, vector<1x128x128xf32>
    %3 = vector.shape_cast %2 : vector<1x128x128xf32> to vector<128x128xf32>
    %cst = arith.constant dense<0.000000e+00> : vector<8x128xf32>
    %4 = tpu.matmul %1, %3, %cst {dimension_numbers = #tpu.dot_dimension_numbers<[1], [0], [0], [1], [0, 0, 1, 1], [], []>} : vector<8x128xf32>, vector<128x128xf32>, vector<8x128xf32> -> vector<8x128xf32>
    %c0_5 = arith.constant 0 : index
    %c0_6 = arith.constant 0 : index
    %c0_7 = arith.constant 0 : index
    %5 = vector.load %arg4[%c0_5, %c0_6, %c0_7] : memref<1x1x128xf32, #tpu.memory_space<vmem>>, vector<1x1x128xf32>
    %6 = vector.shape_cast %5 : vector<1x1x128xf32> to vector<1x128xf32>
    %7 = vector.broadcast %6 : vector<1x128xf32> to vector<8x128xf32>
    %8 = arith.addf %4, %7 : vector<8x128xf32>
    %c0_8 = arith.constant 0 : index
    %c0_9 = arith.constant 0 : index
    %c0_10 = arith.constant 0 : index
    %9 = vector.load %arg5[%c0_8, %c0_9, %c0_10] : memref<1x8x128xf32, #tpu.memory_space<vmem>>, vector<1x8x128xf32>
    %10 = vector.shape_cast %9 : vector<1x8x128xf32> to vector<8x128xf32>
    %11 = vector.shape_cast %8 : vector<8x128xf32> to vector<1x8x128xf32>
    tpu.vector_store %arg5[%c0_8, %c0_9, %c0_10], %11 {strides = array<i32>} : memref<1x8x128xf32, #tpu.memory_space<vmem>>, vector<1x8x128xf32>,
    return
  }
  func.func @transform_0(%arg0: i32, %arg1: i32) -> (i32, i32, i32) {
    %c0_i32 = arith.constant 0 : i32
    %c0_i32_0 = arith.constant 0 : i32
    return %arg0, %arg1, %c0_i32 : i32, i32, i32
  }
  func.func @transform_1(%arg0: i32, %arg1: i32) -> (i32, i32, i32) {
    %c0_i32 = arith.constant 0 : i32
    %c0_i32_0 = arith.constant 0 : i32
    %c0_i32_1 = arith.constant 0 : i32
    return %arg0, %c0_i32, %c0_i32_0 : i32, i32, i32
  }
  func.func @transform_2(%arg0: i32, %arg1: i32) -> (i32, i32, i32) {
    %c0_i32 = arith.constant 0 : i32
    %c0_i32_0 = arith.constant 0 : i32
    %c0_i32_1 = arith.constant 0 : i32
    return %arg0, %c0_i32, %c0_i32_0 : i32, i32, i32
  }
  func.func @transform_3(%arg0: i32, %arg1: i32) -> (i32, i32, i32) {
    %c0_i32 = arith.constant 0 : i32
    %c0_i32_0 = arith.constant 0 : i32
    return %arg0, %arg1, %c0_i32 : i32, i32, i32
  }
}

</mosaic_0001>

<llo_original>
// kernel: tpu_custom_call.1
$region0: #{tpu_custom_call.1}
  #allocation0 [shape = 'u32[]', space=smem, size = 0x4, offset = 0x4, fixed_abs, tag = 'smem constant byte address 0x4 - core index']
  #allocation1 [shape = 'u32[144,128]{1,0:T(1,128)}', space=vmem, size = 0x12000, scoped, tag = 'internal scratch']
  %s0 = inlined_call_operand.hbm [shape: f32[4,8,128], index: 0, kind: input, shape index: {}]
  %s1 = inlined_call_operand.hbm [shape: f32[4,128,128], index: 1, kind: input, shape index: {}]
  %s2 = inlined_call_operand.vmem [shape: f32[4,1,128], index: 2, kind: input, shape index: {}]
  %s3 = inlined_call_operand.hbm [shape: f32[4,8,128], index: 3, kind: output, shape index: {}]
  %s4 = sld [smem:[#allocation0]]
  $region53: #{tpu_custom_call.1} parent=0
    _
  %s6 = ssub.s32 1, %s4
  %s7 = scalar_select 0, %s6, %s4
  $region1: #{tpu_custom_call.1} parent=0
    #allocation2 [shape = 'u8[8192]{0}', space=vmem, size = 0x2000, scoped, tag = 'input window, operand 0']
    #allocation3 [shape = 's32[2]{0}', space=sflag, size = 0x8, scoped, tag = 'scoped memory for tpu_custom_call.1']
    #allocation4 [shape = 's32[2]{0}', space=sflag, size = 0x8, scoped, tag = 'scoped memory for tpu_custom_call.1']
    #allocation5 [shape = 'u8[131072]{0}', space=vmem, size = 0x20000, scoped, tag = 'input window, operand 1']
    #allocation6 [shape = 's32[2]{0}', space=sflag, size = 0x8, scoped, tag = 'scoped memory for tpu_custom_call.1']
    #allocation7 [shape = 'u8[8192]{0}', space=vmem, size = 0x2000, scoped, tag = 'output window, operand 0']
    %8 = vsyncpa [#allocation3], 0
    %s9 = scalar_lea.sflag [#allocation3], 1
    %10 = vsyncpa %s9, 0
    %11 = vsyncpa [#allocation6], 0
    %s12 = scalar_lea.sflag [#allocation6], 1
    %13 = vsyncpa %s12, 0
    %14 = vsyncpa [#allocation4], 0
    %s15 = scalar_lea.sflag [#allocation4], 1
    %16 = vsyncpa %s15, 0
    loop: start=0, step=1, limit=6
    $region2: #{tpu_custom_call.1} parent=1 // loop_pre_header
      _
    $region3: #{tpu_custom_call.1} parent=1 // loop_header
      %s18 = sphi 0, %s22
      %p19 = scmp.ge.s32.totalorder %s18, 6
      %s25 = sphi 0, %s37
      %s26 = sphi 0, %s33
      %s27 = sphi 0, %s25
      %s28 = sphi 0, %s26
      %s29 = sphi 0, %s27
      %s30 = sphi 0, %s28
      %s42 = sphi 0, %s44
      %s45 = sphi 0, %s42
      %s46 = sphi 0, %s45
      %s62 = sphi 0, %s46
      %s68 = sphi 0, %s70
      %s71 = sphi 0, %s68
      %s72 = sphi 0, %s71
      %s88 = sphi 0, %s72
      %s94 = sphi 0, %s96
      %s97 = sphi 0, %s94
      %s98 = sphi 0, %s97
      %s114 = sphi 0, %s98
      %s122 = sphi 0, %s124
      %s125 = sphi 0, %s122
      %s126 = sphi 0, %s125
      %s142 = sphi 0, %s126
    $region4: #{tpu_custom_call.1} parent=1 // loop_header_branch
      %21 = sbr.rel (%p19) target = $region8
    $region5: #{tpu_custom_call.1} parent=1 // loop_body
      %s23 = ssub.s32 %s18, 1
      %s24 = ssub.s32 %s18, 2
      %s31 = sadd.s32 1, %s26
      %p32 = scmp.ge.s32.totalorder %s31, 1
      %s33 = scalar_select %p32, 0, %s31
      %s34 = sadd.s32 1, %s25
      %s35 = scalar_select %p32, %s34, %s25
      %p36 = scmp.ge.s32.totalorder %s35, 4
      %s37 = scalar_select %p36, 0, %s35
      %s38 = ssub.s32 %s25, %s37
      %s39 = ssub.s32 %s26, %s33
      %s40 = sor.u32 %s38, %s39
      %p41 = scmp.eq.s32.totalorder %s40, 0
      %s43 = sadd.s32 %s42, 1
      %s44 = scalar_select %p41, %s42, %s43
      %p47 = pneg %p41
      %p48 = scmp.eq.s32.totalorder %s18, 3
      %p49 = por %p47, %p48
      %p50 = scmp.ne.s32.totalorder %s42, %s45
      %p51 = scmp.eq.s32.totalorder %s18, 0
      %p52 = por %p50, %p51
      %p53 = scmp.ne.s32.totalorder %s42, %s45
      %p54 = scmp.eq.s32.totalorder %s23, 3
      %p55 = por %p53, %p54
      %p56 = scmp.ne.s32.totalorder %s45, %s46
      %p57 = scmp.eq.s32.totalorder %s23, 0
      %p58 = por %p56, %p57
      %p59 = scmp.ne.s32.totalorder %s45, %s46
      %p60 = scmp.eq.s32.totalorder %s24, 3
      %p61 = por %p59, %p60
      %p63 = scmp.ne.s32.totalorder %s46, %s62
      %p64 = scmp.eq.s32.totalorder %s24, 0
      %p65 = por %p63, %p64
      %s66 = ssub.s32 %s25, %s37
      %p67 = scmp.eq.s32.totalorder %s66, 0
      %s69 = sadd.s32 %s68, 1
      %s70 = scalar_select %p67, %s68, %s69
      %p73 = pneg %p67
      %p74 = scmp.eq.s32.totalorder %s18, 3
      %p75 = por %p73, %p74
      %p76 = scmp.ne.s32.totalorder %s68, %s71
      %p77 = scmp.eq.s32.totalorder %s18, 0
      %p78 = por %p76, %p77
      %p79 = scmp.ne.s32.totalorder %s68, %s71
      %p80 = scmp.eq.s32.totalorder %s23, 3
      %p81 = por %p79, %p80
      %p82 = scmp.ne.s32.totalorder %s71, %s72
      %p83 = scmp.eq.s32.totalorder %s23, 0
      %p84 = por %p82, %p83
      %p85 = scmp.ne.s32.totalorder %s71, %s72
      %p86 = scmp.eq.s32.totalorder %s24, 3
      %p87 = por %p85, %p86
      %p89 = scmp.ne.s32.totalorder %s72, %s88
      %p90 = scmp.eq.s32.totalorder %s24, 0
      %p91 = por %p89, %p90
      %s92 = ssub.s32 %s25, %s37
      %p93 = scmp.eq.s32.totalorder %s92, 0
      %s95 = sadd.s32 %s94, 1
      %s96 = scalar_select %p93, %s94, %s95
      %p99 = pneg %p93
      %p100 = scmp.eq.s32.totalorder %s18, 3
      %p101 = por %p99, %p100
      %p102 = scmp.ne.s32.totalorder %s94, %s97
      %p103 = scmp.eq.s32.totalorder %s18, 0
      %p104 = por %p102, %p103
      %p105 = scmp.ne.s32.totalorder %s94, %s97
      %p106 = scmp.eq.s32.totalorder %s23, 3
      %p107 = por %p105, %p106
      %p108 = scmp.ne.s32.totalorder %s97, %s98
      %p109 = scmp.eq.s32.totalorder %s23, 0
      %p110 = por %p108, %p109
      %p111 = scmp.ne.s32.totalorder %s97, %s98
      %p112 = scmp.eq.s32.totalorder %s24, 3
      %p113 = por %p111, %p112
      %p115 = scmp.ne.s32.totalorder %s98, %s114
      %p116 = scmp.eq.s32.totalorder %s24, 0
      %p117 = por %p115, %p116
      %s118 = ssub.s32 %s25, %s37
      %s119 = ssub.s32 %s26, %s33
      %s120 = sor.u32 %s118, %s119
      %p121 = scmp.eq.s32.totalorder %s120, 0
      %s123 = sadd.s32 %s122, 1
      %s124 = scalar_select %p121, %s122, %s123
      %p127 = pneg %p121
      %p128 = scmp.eq.s32.totalorder %s18, 3
      %p129 = por %p127, %p128
      %p130 = scmp.ne.s32.totalorder %s122, %s125
      %p131 = scmp.eq.s32.totalorder %s18, 0
      %p132 = por %p130, %p131
      %p133 = scmp.ne.s32.totalorder %s122, %s125
      %p134 = scmp.eq.s32.totalorder %s23, 3
      %p135 = por %p133, %p134
      %p136 = scmp.ne.s32.totalorder %s125, %s126
      %p137 = scmp.eq.s32.totalorder %s23, 0
      %p138 = por %p136, %p137
      %p139 = scmp.ne.s32.totalorder %s125, %s126
      %p140 = scmp.eq.s32.totalorder %s24, 3
      %p141 = por %p139, %p140
      %p143 = scmp.ne.s32.totalorder %s126, %s142
      %p144 = scmp.eq.s32.totalorder %s24, 0
      %p145 = por %p143, %p144
      %p146 = scmp.le.s32.totalorder 1, %s18
      %p147 = scmp.lt.s32.totalorder %s18, 5
      %p148 = pnand %p146, %p147
      %p149 = pneg %p148
      // Predicated region
      $region9: #{tpu_custom_call.1} parent=5 // pred_check
        _
      $region10: #{tpu_custom_call.1} parent=5 // pred_check_branch
        %151 = sbr.rel (%p148) target = $region12
      $region11: #{tpu_custom_call.1} parent=5 // pred_region
        %s152 = ssub.s32 %s18, 1
      $region12: #{tpu_custom_call.1} parent=5 // pred_fallthru
        _
      %p153 = scmp.lt.s32.totalorder %s18, 4
      // Predicated region
      $region13: #{tpu_custom_call.1} parent=5 // pred_check
        %p154 = pneg %p153
      $region14: #{tpu_custom_call.1} parent=5 // pred_check_branch
        %156 = sbr.rel (%p154) target = $region16
      $region15: #{tpu_custom_call.1} parent=5 // pred_region
        // Predicated region
        $region17: #{tpu_custom_call.1} parent=15 // pred_check
          %p157 = pneg %p52
        $region18: #{tpu_custom_call.1} parent=15 // pred_check_branch
          %159 = sbr.rel (%p157) target = $region20
        $region19: #{tpu_custom_call.1} parent=15 // pred_region
          %s160 = sand.u32 %s42, 1
          %s161 = scalar_lea.sflag [#allocation3], %s160
          %s162 = sand.u32 %s42, 1
          %s163 = smul.addr %s162, 8
          %s164 = scalar_lea.vmem [#allocation2], %s163
          %s166 = ssub.s32 128, 128
          %167 = vsyncadd %s161, %s166
          %s168 = sadd.s32 %s26, %s25
          %s169 = smul.addr %s168, 128
          %s170 = scalar_lea.hbm %s0, %s169
          %s172 = sshll.u32 %s164, 4
          %s173 = int_to_ptr.vmem [resolvable:$true] %s172
          %175 = dma.hbm_to_vmem [thread:$0]  %s170, 128, %s173, %s161
        $region20: #{tpu_custom_call.1} parent=15 // pred_fallthru
          _
        // Predicated region
        $region21: #{tpu_custom_call.1} parent=15 // pred_check
          %p176 = pneg %p78
        $region22: #{tpu_custom_call.1} parent=15 // pred_check_branch
          %178 = sbr.rel (%p176) target = $region24
        $region23: #{tpu_custom_call.1} parent=15 // pred_region
          %s179 = sand.u32 %s68, 1
          %s180 = scalar_lea.sflag [#allocation6], %s179
          %s181 = sand.u32 %s68, 1
          %s182 = smul.addr %s181, 128
          %s183 = scalar_lea.vmem [#allocation5], %s182
          %s185 = ssub.s32 2048, 2048
          %186 = vsyncadd %s180, %s185
          %s187 = smul.addr %s25, 16
          %s188 = smul.addr %s187, 128
          %s189 = scalar_lea.hbm %s1, %s188
          %s190 = sshll.u32 %s183, 4
          %s191 = int_to_ptr.vmem [resolvable:$true] %s190
          %196 = dma.hbm_to_vmem [thread:$0]  %s189, 2048, %s191, %s180, 128, 128, 8
        $region24: #{tpu_custom_call.1} parent=15 // pred_fallthru
          _
        // Predicated region
        $region25: #{tpu_custom_call.1} parent=15 // pred_check
          %p197 = pneg %p104
        $region26: #{tpu_custom_call.1} parent=15 // pred_check_branch
          %199 = sbr.rel (%p197) target = $region28
        $region27: #{tpu_custom_call.1} parent=15 // pred_region
          %p200 = scmp.lt.s32.totalorder %s25, 3
          %s201 = scalar_select %p200, %s25, 3
          %s202 = scalar_lea.vmem %s2, %s201
        $region28: #{tpu_custom_call.1} parent=15 // pred_fallthru
          _
      $region16: #{tpu_custom_call.1} parent=5 // pred_fallthru
        _
      %p203 = scmp.le.s32.totalorder 1, %s18
      %p204 = scmp.lt.s32.totalorder %s18, 5
      %p205 = pnand %p203, %p204
      %p206 = pneg %p205
      // Predicated region
      $region29: #{tpu_custom_call.1} parent=5 // pred_check
        _
      $region30: #{tpu_custom_call.1} parent=5 // pred_check_branch
        %208 = sbr.rel (%p205) target = $region32
      $region31: #{tpu_custom_call.1} parent=5 // pred_region
        %s209 = ssub.s32 %s18, 1
        %s210 = sand.u32 %s45, 1
        %s211 = scalar_lea.sflag [#allocation3], %s210
        %s212 = sand.u32 %s45, 1
        %s213 = smul.addr %s212, 8
        %s214 = scalar_lea.vmem [#allocation2], %s213
        // Predicated region
        $region33: #{tpu_custom_call.1} parent=31 // pred_check
          %p215 = pneg %p58
        $region34: #{tpu_custom_call.1} parent=31 // pred_check_branch
          %217 = sbr.rel (%p215) target = $region36
        $region35: #{tpu_custom_call.1} parent=31 // pred_region
          %218 = dma.done %s211, 128
        $region36: #{tpu_custom_call.1} parent=31 // pred_fallthru
          _
        %s219 = sand.u32 %s71, 1
        %s220 = scalar_lea.sflag [#allocation6], %s219
        %s221 = sand.u32 %s71, 1
        %s222 = smul.addr %s221, 128
        %s223 = scalar_lea.vmem [#allocation5], %s222
        // Predicated region
        $region37: #{tpu_custom_call.1} parent=31 // pred_check
          %p224 = pneg %p84
        $region38: #{tpu_custom_call.1} parent=31 // pred_check_branch
          %226 = sbr.rel (%p224) target = $region40
        $region39: #{tpu_custom_call.1} parent=31 // pred_region
          %227 = dma.done %s220, 2048
        $region40: #{tpu_custom_call.1} parent=31 // pred_fallthru
          _
        %s228 = sand.u32 %s45, 1
        %s229 = scalar_lea.sflag [#allocation3], %s228
        %s230 = sand.u32 %s45, 1
        %s231 = smul.addr %s230, 8
        %s232 = scalar_lea.vmem [#allocation2], %s231
        %p233 = pneg %p58
        %p234 = pneg %p55
        %s235 = sand.u32 %s71, 1
        %s236 = scalar_lea.sflag [#allocation6], %s235
        %s237 = sand.u32 %s71, 1
        %s238 = smul.addr %s237, 128
        %s239 = scalar_lea.vmem [#allocation5], %s238
        %p240 = pneg %p84
        %p241 = pneg %p81
        %p242 = scmp.lt.s32.totalorder %s27, 3
        %s243 = scalar_select %p242, %s27, 3
        %s244 = scalar_lea.vmem %s2, %s243
        %p245 = pneg %p110
        %p246 = pneg %p107
        %p247 = pneg %p138
        %p248 = pneg %p135
        %s249 = sand.u32 %s125, 1
        %s250 = scalar_lea.sflag [#allocation4], %s249
        %s251 = sand.u32 %s125, 1
        %s252 = smul.addr %s251, 8
        %s253 = scalar_lea.vmem [#allocation7], %s252
        %p254 = scmp.lt.s32.totalorder %s27, 3
        %s255 = scalar_select %p254, %s27, 3
        %s256 = scalar_lea.vmem %s2, %s255
        %v257 = vld [vmem:[%s214] sm:$0xff]
        %v258 = vld [vmem:[%s223] sm:$0xff]
        %v259 = vld [vmem:[%s223 + $0x8] sm:$0xff]
        %v260 = vld [vmem:[%s223 + $0x10] sm:$0xff]
        %v261 = vld [vmem:[%s223 + $0x18] sm:$0xff]
        %v262 = vld [vmem:[%s223 + $0x20] sm:$0xff]
        %v263 = vld [vmem:[%s223 + $0x28] sm:$0xff]
        %v264 = vld [vmem:[%s223 + $0x30] sm:$0xff]
        %v265 = vld [vmem:[%s223 + $0x38] sm:$0xff]
        %v266 = vld [vmem:[%s223 + $0x40] sm:$0xff]
        %v267 = vld [vmem:[%s223 + $0x48] sm:$0xff]
        %v268 = vld [vmem:[%s223 + $0x50] sm:$0xff]
        %v269 = vld [vmem:[%s223 + $0x58] sm:$0xff]
        %v270 = vld [vmem:[%s223 + $0x60] sm:$0xff]
        %v271 = vld [vmem:[%s223 + $0x68] sm:$0xff]
        %v272 = vld [vmem:[%s223 + $0x70] sm:$0xff]
        %v273 = vld [vmem:[%s223 + $0x78] sm:$0xff]
        %v274 = vld [vmem:[%s256] sm:$0x1]
        %v276 = vlaneseq
        %v277 = vshrl.u32 %v276, 7
        %v278 = vsub.s32 0, %v277
        %v279 = vrot.slane %v274, %v278
        %281 = vmatprep.subr.mxu0 0.0
        %282 = vmatpush1.msra.mxu0 %v258
        %283 = vmatprep.subr.mxu0 0.0
        %284 = vmatpush1.msra.mxu0 %v259
        %285 = vmatprep.subr.mxu0 0.0
        %286 = vmatpush1.msra.mxu0 %v260
        %287 = vmatprep.subr.mxu0 0.0
        %288 = vmatpush1.msra.mxu0 %v261
        %289 = vmatprep.subr.mxu0 0.0
        %290 = vmatpush1.msra.mxu0 %v262
        %291 = vmatprep.subr.mxu0 0.0
        %292 = vmatpush1.msra.mxu0 %v263
        %293 = vmatprep.subr.mxu0 0.0
        %294 = vmatpush1.msra.mxu0 %v264
        %295 = vmatprep.subr.mxu0 0.0
        %296 = vmatpush1.msra.mxu0 %v265
        %297 = vmatprep.subr.mxu0 0.0
        %298 = vmatpush1.msra.mxu0 %v266
        %299 = vmatprep.subr.mxu0 0.0
        %300 = vmatpush1.msra.mxu0 %v267
        %301 = vmatprep.subr.mxu0 0.0
        %302 = vmatpush1.msra.mxu0 %v268
        %303 = vmatprep.subr.mxu0 0.0
        %304 = vmatpush1.msra.mxu0 %v269
        %305 = vmatprep.subr.mxu0 0.0
        %306 = vmatpush1.msra.mxu0 %v270
        %307 = vmatprep.subr.mxu0 0.0
        %308 = vmatpush1.msra.mxu0 %v271
        %309 = vmatprep.subr.mxu0 0.0
        %310 = vmatpush1.msra.mxu0 %v272
        %311 = vmatprep.subr.mxu0 0.0
        %312 = vmatpush1.msra.mxu0 %v273
        %313 = vmatprep.subr.mxu0 0.0
        %314 = vmatpush1.msra.mxu0 0.0
        %315 = vmatprep.subr.mxu0 0.0
        %316 = vmatpush1.msra.mxu0 0.0
        %317 = vmatprep.subr.mxu0 0.0
        %318 = vmatpush1.msra.mxu0 0.0
        %319 = vmatprep.subr.mxu0 0.0
        %320 = vmatpush1.msra.mxu0 0.0
        %321 = vmatprep.subr.mxu0 0.0
        %322 = vmatpush1.msra.mxu0 0.0
        %323 = vmatprep.subr.mxu0 0.0
        %324 = vmatpush1.msra.mxu0 0.0
        %325 = vmatprep.subr.mxu0 0.0
        %326 = vmatpush1.msra.mxu0 0.0
        %327 = vmatprep.subr.mxu0 0.0
        %328 = vmatpush1.msra.mxu0 0.0
        %329 = vmatprep.subr.mxu0 0.0
        %330 = vmatpush1.msra.mxu0 0.0
        %331 = vmatprep.subr.mxu0 0.0
        %332 = vmatpush1.msra.mxu0 0.0
        %333 = vmatprep.subr.mxu0 0.0
        %334 = vmatpush1.msra.mxu0 0.0
        %335 = vmatprep.subr.mxu0 0.0
        %336 = vmatpush1.msra.mxu0 0.0
        %337 = vmatprep.subr.mxu0 0.0
        %338 = vmatpush1.msra.mxu0 0.0
        %339 = vmatprep.subr.mxu0 0.0
        %340 = vmatpush1.msra.mxu0 0.0
        %341 = vmatprep.subr.mxu0 0.0
        %342 = vmatpush1.msra.mxu0 0.0
        %343 = vmatprep.subr.mxu0 0.0
        %344 = vmatpush1.msra.mxu0 0.0
        %345 = vmatprep.mubr.f32.mxu0 0.0
        %346 = vmatmul.mubr.f32.gmra.mrb[0].mxu0 %v257
        %v347 = vpop.f32.mrb[0].mxu0
        %v348 = vadd.f32 %v279, %v347
        %v349 = vpop.f32.mrb[0].mxu0
        %350 = vdwg.mxu0
        %351 = vst [vmem:[%s253] sm:$0xff] %v348
        %s352 = sand.u32 %s125, 1
        %s353 = scalar_lea.sflag [#allocation4], %s352
        %s354 = sand.u32 %s125, 1
        %s355 = smul.addr %s354, 8
        %s356 = scalar_lea.vmem [#allocation7], %s355
        // Predicated region
        $region41: #{tpu_custom_call.1} parent=31 // pred_check
          %p357 = pneg %p135
        $region42: #{tpu_custom_call.1} parent=31 // pred_check_branch
          %359 = sbr.rel (%p357) target = $region44
        $region43: #{tpu_custom_call.1} parent=31 // pred_region
          %s361 = ssub.s32 128, 128
          %362 = vsyncadd %s353, %s361
          %s363 = sadd.s32 %s28, %s27
          %s364 = smul.addr %s363, 128
          %s365 = scalar_lea.hbm %s3, %s364
          %s367 = sshll.u32 %s356, 4
          %s368 = int_to_ptr.vmem [resolvable:$true] %s367
          %370 = dma.vmem_to_hbm [thread:$0]  %s368, 128, %s365, %s353
        $region44: #{tpu_custom_call.1} parent=31 // pred_fallthru
          _
      $region32: #{tpu_custom_call.1} parent=5 // pred_fallthru
        _
      %p371 = scmp.le.s32.totalorder 2, %s18
      // Predicated region
      $region45: #{tpu_custom_call.1} parent=5 // pred_check
        %p372 = pneg %p371
      $region46: #{tpu_custom_call.1} parent=5 // pred_check_branch
        %374 = sbr.rel (%p372) target = $region48
      $region47: #{tpu_custom_call.1} parent=5 // pred_region
        %s375 = ssub.s32 %s18, 2
        // Predicated region
        $region49: #{tpu_custom_call.1} parent=47 // pred_check
          %p376 = pneg %p141
        $region50: #{tpu_custom_call.1} parent=47 // pred_check_branch
          %378 = sbr.rel (%p376) target = $region52
        $region51: #{tpu_custom_call.1} parent=47 // pred_region
          %s379 = sand.u32 %s126, 1
          %s380 = scalar_lea.sflag [#allocation4], %s379
          %s381 = sand.u32 %s126, 1
          %s382 = smul.addr %s381, 8
          %s383 = scalar_lea.vmem [#allocation7], %s382
          %384 = dma.done %s380, 128
        $region52: #{tpu_custom_call.1} parent=47 // pred_fallthru
          _
      $region48: #{tpu_custom_call.1} parent=5 // pred_fallthru
        _
    $region6: #{tpu_custom_call.1} parent=1 // loop_footer
      %s22 = sadd.s32 1, %s18
    $region7: #{tpu_custom_call.1} parent=1 // loop_footer_branch
      %17 = sbr.rel target = $region3
    $region8: #{tpu_custom_call.1} parent=1 // loop_exit
      _
    %385 = vsyncpa [#allocation3], 1
    %s386 = scalar_lea.sflag [#allocation3], 1
    %387 = vsyncpa %s386, 1
    %388 = vsyncpa [#allocation6], 1
    %s389 = scalar_lea.sflag [#allocation6], 1
    %390 = vsyncpa %s389, 1
    %391 = vsyncpa [#allocation4], 1
    %s392 = scalar_lea.sflag [#allocation4], 1
    %393 = vsyncpa %s392, 1

</llo_original>
